<compile_context>
chip_gen: v7x
topology: tpu7x:2x2x1
jax: 0.10.0
libtpu: 0.0.40
codegen_flags: <defaults>
</compile_context>

<pallas_src>
import numpy as np
import jax
import jax.numpy as jnp
from jax.experimental import pallas as pl
from jax.experimental.pallas import tpu as pltpu

NUM_PIN_LINEAR_BASIS_ELEMENTS = 9
MV_DIM = 16

# Blade ordering: 1 | e0 e1 e2 e3 | e01 e02 e03 e12 e13 e23 | e012 e013 e023 e123 | e0123
_GRADES = [0, 1, 1, 1, 1, 2, 2, 2, 2, 2, 2, 3, 3, 3, 3, 4]
# x -> e0 ^ <x>_k maps (src blade index -> dst blade index), k = 0..3
_E0_MAPS = {
    0: [(0, 1)],
    1: [(2, 5), (3, 6), (4, 7)],
    2: [(8, 11), (9, 12), (10, 13)],
    3: [(14, 15)],
}


def compute_pin_equi_linear_basis(normalize: bool = True) -> jnp.ndarray:
    """The 9 Pin(3,0,1)-equivariant linear basis maps, shape (9, 16, 16)."""
    basis = np.zeros((NUM_PIN_LINEAR_BASIS_ELEMENTS, MV_DIM, MV_DIM), np.float32)
    for g in range(5):                                  # 5 grade projections
        for idx, grade in enumerate(_GRADES):
            if grade == g:
                basis[g, idx, idx] = 1.0
    for k in range(4):                                  # 4 "multiply by e0" maps
        for src, dst in _E0_MAPS[k]:
            basis[5 + k, dst, src] = 1.0
    if normalize:
        norms = np.linalg.norm(basis, axis=(1, 2), keepdims=True)
        basis = basis / norms
    return jnp.asarray(basis)


def init_mv_linear(key, in_channels, out_channels, bias=True, splits=1):
    """Deterministic re-implementation of MVLinear.__init__ parameter setup."""
    assert out_channels % splits == 0
    # _compute_init_factors(1.0, 1/sqrt(3), True)
    mv_component_factors = np.sqrt(
        np.array([1.0, 4.0, 6.0, 2.0, 0.5, 0.5, 1.5, 1.5, 0.5], np.float32))
    mv_factor = 1.0 * (1.0 / np.sqrt(3.0)) * np.sqrt(3.0)
    bound = mv_factor / np.sqrt(in_channels)
    scale = jnp.asarray(mv_component_factors * bound, jnp.float32)
    keys = jax.random.split(key, splits)
    parts = []
    for i in range(splits):
        u = jax.random.uniform(
            keys[i],
            (out_channels // splits, in_channels, NUM_PIN_LINEAR_BASIS_ELEMENTS),
            minval=-1.0, maxval=1.0, dtype=jnp.float32)
        parts.append(u * scale)
    weight = jnp.concatenate(parts, axis=0)             # (out_channels, in_channels, 9)
    b = jnp.zeros((out_channels, 1), jnp.float32) if bias else None
    return weight, b


def _round_up(x, m):
    return ((x + m - 1) // m) * m


def _cdiv(a, b):
    return (a + b - 1) // b


def _pick_tile(total, target, base):
    """Largest multiple-of-`base` divisor of `total` that is <= target; else `total`."""
    if total <= target:
        return total
    if total % base == 0:
        start = (target // base) * base
        for cand in range(start, 0, -base):
            if total % cand == 0:
                return cand
    return total


def _divisor_tiles_desc(total, base=128):
    """Multiple-of-`base` divisors of `total`, descending (total first)."""
    if total % base != 0:
        return [total]
    return [c for c in range(total, 0, -base) if total % c == 0]


def fold_mv_linear_params(weight, bias, basis, dtype=jnp.float32):
    """One-time (per weight update) fold of the Pin-equivariant basis into a plain matmul.

    weight: (cout, cin, 9), bias: (cout, 1) or None, basis: (9, 16, 16)
    Returns:
      w_mat:    (cin*16, round_up(cout*16, 128))  cast to `dtype`, zero-padded along N
      bias_row: (1,      round_up(cout*16, 128))  scalar-blade-embedded bias, same pad/cast
      out_dim:  cout*16 (un-padded logical output width)
    """
    cout, cin, _ = weight.shape
    # M[(x,j),(y,i)] = sum_a W[y,x,a] basis[a,i,j]
    w_mat = jnp.einsum('yxa,aij->xjyi', weight, basis).reshape(cin * MV_DIM, cout * MV_DIM)
    bias_mv = jnp.zeros((cout, MV_DIM), jnp.float32)
    if bias is not None:
        bias_mv = bias_mv.at[:, 0].set(bias[:, 0])      # embed_scalar: only blade 0 non-zero
    bias_row = bias_mv.reshape(1, cout * MV_DIM)
    out_dim = cout * MV_DIM
    n_pad = _round_up(out_dim, 128)
    if n_pad != out_dim:                                # lane-align N once, here, not per call
        w_mat = jnp.pad(w_mat, ((0, 0), (0, n_pad - out_dim)))
        bias_row = jnp.pad(bias_row, ((0, 0), (0, n_pad - out_dim)))
    return w_mat.astype(dtype), bias_row.astype(dtype), out_dim


def _mv_linear_kernel(x_ref, w_ref, b_ref, o_ref):
    # Primary path: full-K resident weight.  x: (tm, K) streams; w: (K, tn), b: (1, tn) resident.
    acc = jnp.dot(x_ref[...], w_ref[...], preferred_element_type=jnp.float32)
    o_ref[...] = (acc + b_ref[...].astype(jnp.float32)).astype(o_ref.dtype)


def _mv_linear_reduce_kernel(x_ref, w_ref, b_ref, o_ref, acc_ref):
    # Fallback (huge cin/cout only): K is a trailing "arbitrary" reduction axis.
    k = pl.program_id(2)

    @pl.when(k == 0)
    def _():
        acc_ref[...] = jnp.zeros_like(acc_ref)

    acc_ref[...] += jnp.dot(x_ref[...], w_ref[...], preferred_element_type=jnp.float32)

    @pl.when(k == pl.num_programs(2) - 1)
    def _():
        o_ref[...] = (acc_ref[...] + b_ref[...].astype(jnp.float32)).astype(o_ref.dtype)


def mv_linear_forward(multivectors, w_mat, bias_row, out_dim=None, *, block_rows=512):
    """Pallas equivalent of MVLinear.forward.

    multivectors: (..., in_channels, 16)
    w_mat, bias_row, out_dim: from fold_mv_linear_params
    returns (outputs_mv, None) with outputs_mv: (..., out_channels, 16)
    """
    *lead, cin, mv = multivectors.shape
    assert mv == MV_DIM
    K, n_pad = w_mat.shape
    assert K == cin * MV_DIM
    if out_dim is None:
        out_dim = n_pad
    cout = out_dim // MV_DIM
    dtype = multivectors.dtype
    if w_mat.dtype != dtype:          # no-op when fold_mv_linear_params used the right dtype
        w_mat = w_mat.astype(dtype)
    if bias_row.dtype != dtype:
        bias_row = bias_row.astype(dtype)
    itemsize = jnp.dtype(dtype).itemsize
    sublane = 8 if itemsize >= 4 else 32 // itemsize    # 8 f32, 16 bf16, 32 int8/fp8

    rows = int(np.prod(lead)) if lead else 1
    x_flat = multivectors.reshape(rows, K)              # no padding copy; grid handles raggedness

    # ---- row tile: big, sublane-rounded; keep >= 2 row tiles so both v7x TCs get work ----
    tm = min(_round_up(block_rows, sublane), _round_up(rows, sublane))
    if _cdiv(rows, tm) < 2 and rows > sublane:
        tm_half = _round_up(_cdiv(rows, 2), sublane)
        if _cdiv(rows, tm_half) >= 2:
            tm = tm_half
    n_row = _cdiv(rows, tm)

    # ---- VMEM budget: conservative fraction of physical VMEM (64 MiB v7x / 128 MiB v5e-v6e) ----
    try:
        phys_vmem = int(pltpu.get_tpu_info().vmem_capacity_bytes)
    except Exception:
        phys_vmem = 64 * 2**20                          # assume the smallest (v7x) if unknown
    vmem_cap = min(phys_vmem * 3 // 4, 112 * 2**20)

    def resident_bytes(tn_):
        # x/out double-buffered; weight + bias conservatively counted double-buffered too.
        return 2 * itemsize * (tm * K + K * tn_ + tn_ + tm * tn_)

    # ---- primary path: full-K resident weight; N as a single lane-dense tile when it fits ----
    use_reduce = False
    tn = n_pad
    if resident_bytes(tn) > vmem_cap:
        for cand in _divisor_tiles_desc(n_pad):
            if resident_bytes(cand) <= vmem_cap:
                tn = cand
                break
        else:
            use_reduce = True

    if not use_reduce:
        vmem_limit = int(min(vmem_cap, max(2 * resident_bytes(tn), 32 * 2**20)))
        out = pl.pallas_call(
            _mv_linear_kernel,
            out_shape=jax.ShapeDtypeStruct((rows, n_pad), dtype),
            grid_spec=pltpu.PrefetchScalarGridSpec(
                num_scalar_prefetch=0,
                grid=(n_row, n_pad // tn),
                in_specs=[
                    pl.BlockSpec((tm, K), lambda i, j: (i, 0)),   # x streamed exactly once
                    pl.BlockSpec((K, tn), lambda i, j: (0, j)),   # weight resident (tn == n_pad typical)
                    pl.BlockSpec((1, tn), lambda i, j: (0, j)),
                ],
                out_specs=pl.BlockSpec((tm, tn), lambda i, j: (i, j)),
            ),
            compiler_params=pltpu.CompilerParams(
                dimension_semantics=("parallel", "parallel"),
                vmem_limit_bytes=vmem_limit,
            ),
        )(x_flat, w_mat, bias_row)
    else:
        # ---- fallback for very large cin*16 / cout*16: tiled K reduction, f32 accumulator ----
        tn = _pick_tile(n_pad, 512, 128)
        tk = _pick_tile(K, 512, 128)
        est = 2 * itemsize * (tm * tk + tk * tn + tn + tm * tn) + 4 * tm * tn
        vmem_limit = int(min(vmem_cap, max(2 * est, 32 * 2**20)))
        out = pl.pallas_call(
            _mv_linear_reduce_kernel,
            out_shape=jax.ShapeDtypeStruct((rows, n_pad), dtype),
            grid_spec=pltpu.PrefetchScalarGridSpec(
                num_scalar_prefetch=0,
                grid=(n_row, n_pad // tn, K // tk),
                in_specs=[
                    pl.BlockSpec((tm, tk), lambda i, j, k: (i, k)),
                    pl.BlockSpec((tk, tn), lambda i, j, k: (k, j)),
                    pl.BlockSpec((1, tn), lambda i, j, k: (0, j)),
                ],
                out_specs=pl.BlockSpec((tm, tn), lambda i, j, k: (i, j)),
                scratch_shapes=[pltpu.VMEM((tm, tn), jnp.float32)],
            ),
            compiler_params=pltpu.CompilerParams(
                dimension_semantics=("parallel", "parallel", "arbitrary"),
                vmem_limit_bytes=vmem_limit,
            ),
        )(x_flat, w_mat, bias_row)

    if out_dim != n_pad:
        out = out[:, :out_dim]
    outputs_mv = out.reshape(*lead, cout, MV_DIM)
    return outputs_mv, None


def _reference_forward(multivectors, weight, bias, basis):
    out = jnp.einsum('yxa,aij,...xj->...yi', weight, basis, multivectors,
                     precision=jax.lax.Precision.HIGHEST)
    if bias is not None:
        cout = bias.shape[0]
        bias_mv = jnp.zeros((cout, MV_DIM), multivectors.dtype).at[:, 0].set(bias[:, 0])
        out = out + bias_mv
    return out


if __name__ == "__main__":
    key = jax.random.PRNGKey(0)
    k_x, k_w = jax.random.split(key)

    batch, items, in_channels, out_channels = 2, 8, 4, 8
    x = jax.random.normal(k_x, (batch, items, in_channels, MV_DIM), jnp.float32)

    basis = compute_pin_equi_linear_basis(normalize=True)
    weight, bias = init_mv_linear(k_w, in_channels, out_channels, bias=True, splits=1)

    # One-time fold (per weight update): basis fold, bias embedding, dtype cast, lane-pad of N.
    w_mat, bias_row, out_dim = fold_mv_linear_params(weight, bias, basis, dtype=x.dtype)

    out, aux = mv_linear_forward(x, w_mat, bias_row, out_dim)
    out = jax.block_until_ready(out)
    assert aux is None
    assert out.shape == (batch, items, out_channels, MV_DIM)

    ref = jax.block_until_ready(_reference_forward(x, weight, bias, basis))
    np.testing.assert_allclose(np.asarray(out), np.asarray(ref), rtol=1e-4, atol=1e-5)

    print("KERNEL_OK")
</pallas_src>

<mosaic_0001>
module attributes {stable_mosaic.version = 11 : i64} {
  func.func @_mv_linear_kernel(%arg0: i32, %arg1: i32, %arg2: memref<8x64xf32, #tpu.memory_space<vmem>>, %arg3: memref<64x128xf32, #tpu.memory_space<vmem>>, %arg4: memref<1x128xf32, #tpu.memory_space<vmem>>, %arg5: memref<8x128xf32, #tpu.memory_space<vmem>>) attributes {dimension_semantics = [#tpu.dimension_semantics<parallel>, #tpu.dimension_semantics<parallel>], iteration_bounds = array<i64: 2, 1>, scalar_prefetch = 0 : i64, scratch_operands = 0 : i64, tpu.core_type = #tpu.core_type<tc>, window_params = [{transform_indices = @transform_0, window_bounds = array<i64: 8, 64>}, {transform_indices = @transform_1, window_bounds = array<i64: 64, 128>}, {transform_indices = @transform_2, window_bounds = array<i64: 1, 128>}, {transform_indices = @transform_3, window_bounds = array<i64: 8, 128>}]} {
    %c0 = arith.constant 0 : index
    %c0_0 = arith.constant 0 : index
    %0 = vector.load %arg2[%c0, %c0_0] : memref<8x64xf32, #tpu.memory_space<vmem>>, vector<8x64xf32>
    %c0_1 = arith.constant 0 : index
    %c0_2 = arith.constant 0 : index
    %1 = vector.load %arg3[%c0_1, %c0_2] : memref<64x128xf32, #tpu.memory_space<vmem>>, vector<64x128xf32>
    %cst = arith.constant dense<0.000000e+00> : vector<8x128xf32>
    %2 = tpu.matmul %0, %1, %cst {dimension_numbers = #tpu.dot_dimension_numbers<[1], [0], [0], [1], [0, 0, 1, 1], [], []>} : vector<8x64xf32>, vector<64x128xf32>, vector<8x128xf32> -> vector<8x128xf32>
    %c0_3 = arith.constant 0 : index
    %c0_4 = arith.constant 0 : index
    %3 = vector.load %arg4[%c0_3, %c0_4] : memref<1x128xf32, #tpu.memory_space<vmem>>, vector<1x128xf32>
    %4 = vector.broadcast %3 : vector<1x128xf32> to vector<8x128xf32>
    %5 = arith.addf %2, %4 : vector<8x128xf32>
    %c0_5 = arith.constant 0 : index
    %c0_6 = arith.constant 0 : index
    %6 = vector.load %arg5[%c0_5, %c0_6] : memref<8x128xf32, #tpu.memory_space<vmem>>, vector<8x128xf32>
    tpu.vector_store %arg5[%c0_5, %c0_6], %5 {strides = array<i32>} : memref<8x128xf32, #tpu.memory_space<vmem>>, vector<8x128xf32>,
    return
  }
  func.func @transform_0(%arg0: i32, %arg1: i32) -> (i32, i32) {
    %c0_i32 = arith.constant 0 : i32
    %c0_i32_0 = arith.constant 0 : i32
    return %arg0, %c0_i32 : i32, i32
  }
  func.func @transform_1(%arg0: i32, %arg1: i32) -> (i32, i32) {
    %c0_i32 = arith.constant 0 : i32
    %c0_i32_0 = arith.constant 0 : i32
    return %c0_i32, %arg1 : i32, i32
  }
  func.func @transform_2(%arg0: i32, %arg1: i32) -> (i32, i32) {
    %c0_i32 = arith.constant 0 : i32
    %c0_i32_0 = arith.constant 0 : i32
    return %c0_i32, %arg1 : i32, i32
  }
  func.func @transform_3(%arg0: i32, %arg1: i32) -> (i32, i32) {
    %c0_i32 = arith.constant 0 : i32
    return %arg0, %arg1 : i32, i32
  }
}

</mosaic_0001>

<llo_original>
// kernel: tpu_custom_call.1
$region0: #{tpu_custom_call.1}
  #allocation0 [shape = 'u32[]', space=smem, size = 0x4, offset = 0x4, fixed_abs, tag = 'smem constant byte address 0x4 - core index']
  #allocation1 [shape = 'u32[144,128]{1,0:T(1,128)}', space=vmem, size = 0x12000, scoped, tag = 'internal scratch']
  %s0 = inlined_call_operand.hbm [shape: f32[16,64], index: 0, kind: input, shape index: {}]
  %s1 = inlined_call_operand.hbm [shape: f32[64,128], index: 1, kind: input, shape index: {}]
  %s2 = inlined_call_operand.vmem [shape: f32[1,128], index: 2, kind: input, shape index: {}]
  %s3 = inlined_call_operand.hbm [shape: f32[16,128], index: 3, kind: output, shape index: {}]
  %s4 = sld [smem:[#allocation0]]
  $region53: #{tpu_custom_call.1} parent=0
    _
  %s6 = ssub.s32 1, %s4
  %s7 = scalar_select 0, %s6, %s4
  $region1: #{tpu_custom_call.1} parent=0
    #allocation2 [shape = 'u8[8192]{0}', space=vmem, size = 0x2000, scoped, tag = 'input window, operand 0']
    #allocation3 [shape = 's32[2]{0}', space=sflag, size = 0x8, scoped, tag = 'scoped memory for tpu_custom_call.1']
    #allocation4 [shape = 's32[2]{0}', space=sflag, size = 0x8, scoped, tag = 'scoped memory for tpu_custom_call.1']
    #allocation5 [shape = 'u8[32768]{0}', space=vmem, size = 0x8000, scoped, tag = 'input window, operand 1, single buffered']
    #allocation6 [shape = 's32[1]{0}', space=sflag, size = 0x4, scoped, tag = 'scoped memory for tpu_custom_call.1']
    #allocation7 [shape = 'u8[8192]{0}', space=vmem, size = 0x2000, scoped, tag = 'output window, operand 0']
    %8 = vsyncpa [#allocation3], 0
    %s9 = scalar_lea.sflag [#allocation3], 1
    %10 = vsyncpa %s9, 0
    %11 = vsyncpa [#allocation6], 0
    %12 = vsyncpa [#allocation4], 0
    %s13 = scalar_lea.sflag [#allocation4], 1
    %14 = vsyncpa %s13, 0
    loop: start=0, step=1, limit=4
    $region2: #{tpu_custom_call.1} parent=1 // loop_pre_header
      _
    $region3: #{tpu_custom_call.1} parent=1 // loop_header
      %s16 = sphi 0, %s20
      %p17 = scmp.ge.s32.totalorder %s16, 4
      %s23 = sphi 0, %s35
      %s24 = sphi 0, %s31
      %s25 = sphi 0, %s23
      %s26 = sphi 0, %s24
      %s27 = sphi 0, %s25
      %s28 = sphi 0, %s26
      %s38 = sphi 0, %s40
      %s41 = sphi 0, %s38
      %s42 = sphi 0, %s41
      %s58 = sphi 0, %s42
      %s64 = sphi 0, %s66
      %s67 = sphi 0, %s64
      %s68 = sphi 0, %s67
      %s84 = sphi 0, %s68
      %s90 = sphi 0, %s92
      %s93 = sphi 0, %s90
      %s94 = sphi 0, %s93
      %s110 = sphi 0, %s94
      %s118 = sphi 0, %s120
      %s121 = sphi 0, %s118
      %s122 = sphi 0, %s121
      %s138 = sphi 0, %s122
    $region4: #{tpu_custom_call.1} parent=1 // loop_header_branch
      %19 = sbr.rel (%p17) target = $region8
    $region5: #{tpu_custom_call.1} parent=1 // loop_body
      %s21 = ssub.s32 %s16, 1
      %s22 = ssub.s32 %s16, 2
      %s29 = sadd.s32 1, %s24
      %p30 = scmp.ge.s32.totalorder %s29, 1
      %s31 = scalar_select %p30, 0, %s29
      %s32 = sadd.s32 1, %s23
      %s33 = scalar_select %p30, %s32, %s23
      %p34 = scmp.ge.s32.totalorder %s33, 2
      %s35 = scalar_select %p34, 0, %s33
      %s36 = ssub.s32 %s23, %s35
      %p37 = scmp.eq.s32.totalorder %s36, 0
      %s39 = sadd.s32 %s38, 1
      %s40 = scalar_select %p37, %s38, %s39
      %p43 = pneg %p37
      %p44 = scmp.eq.s32.totalorder %s16, 1
      %p45 = por %p43, %p44
      %p46 = scmp.ne.s32.totalorder %s38, %s41
      %p47 = scmp.eq.s32.totalorder %s16, 0
      %p48 = por %p46, %p47
      %p49 = scmp.ne.s32.totalorder %s38, %s41
      %p50 = scmp.eq.s32.totalorder %s21, 1
      %p51 = por %p49, %p50
      %p52 = scmp.ne.s32.totalorder %s41, %s42
      %p53 = scmp.eq.s32.totalorder %s21, 0
      %p54 = por %p52, %p53
      %p55 = scmp.ne.s32.totalorder %s41, %s42
      %p56 = scmp.eq.s32.totalorder %s22, 1
      %p57 = por %p55, %p56
      %p59 = scmp.ne.s32.totalorder %s42, %s58
      %p60 = scmp.eq.s32.totalorder %s22, 0
      %p61 = por %p59, %p60
      %s62 = ssub.s32 %s24, %s31
      %p63 = scmp.eq.s32.totalorder %s62, 0
      %s65 = sadd.s32 %s64, 1
      %s66 = scalar_select %p63, %s64, %s65
      %p69 = pneg %p63
      %p70 = scmp.eq.s32.totalorder %s16, 1
      %p71 = por %p69, %p70
      %p72 = scmp.ne.s32.totalorder %s64, %s67
      %p73 = scmp.eq.s32.totalorder %s16, 0
      %p74 = por %p72, %p73
      %p75 = scmp.ne.s32.totalorder %s64, %s67
      %p76 = scmp.eq.s32.totalorder %s21, 1
      %p77 = por %p75, %p76
      %p78 = scmp.ne.s32.totalorder %s67, %s68
      %p79 = scmp.eq.s32.totalorder %s21, 0
      %p80 = por %p78, %p79
      %p81 = scmp.ne.s32.totalorder %s67, %s68
      %p82 = scmp.eq.s32.totalorder %s22, 1
      %p83 = por %p81, %p82
      %p85 = scmp.ne.s32.totalorder %s68, %s84
      %p86 = scmp.eq.s32.totalorder %s22, 0
      %p87 = por %p85, %p86
      %s88 = ssub.s32 %s24, %s31
      %p89 = scmp.eq.s32.totalorder %s88, 0
      %s91 = sadd.s32 %s90, 1
      %s92 = scalar_select %p89, %s90, %s91
      %p95 = pneg %p89
      %p96 = scmp.eq.s32.totalorder %s16, 1
      %p97 = por %p95, %p96
      %p98 = scmp.ne.s32.totalorder %s90, %s93
      %p99 = scmp.eq.s32.totalorder %s16, 0
      %p100 = por %p98, %p99
      %p101 = scmp.ne.s32.totalorder %s90, %s93
      %p102 = scmp.eq.s32.totalorder %s21, 1
      %p103 = por %p101, %p102
      %p104 = scmp.ne.s32.totalorder %s93, %s94
      %p105 = scmp.eq.s32.totalorder %s21, 0
      %p106 = por %p104, %p105
      %p107 = scmp.ne.s32.totalorder %s93, %s94
      %p108 = scmp.eq.s32.totalorder %s22, 1
      %p109 = por %p107, %p108
      %p111 = scmp.ne.s32.totalorder %s94, %s110
      %p112 = scmp.eq.s32.totalorder %s22, 0
      %p113 = por %p111, %p112
      %s114 = ssub.s32 %s23, %s35
      %s115 = ssub.s32 %s24, %s31
      %s116 = sor.u32 %s114, %s115
      %p117 = scmp.eq.s32.totalorder %s116, 0
      %s119 = sadd.s32 %s118, 1
      %s120 = scalar_select %p117, %s118, %s119
      %p123 = pneg %p117
      %p124 = scmp.eq.s32.totalorder %s16, 1
      %p125 = por %p123, %p124
      %p126 = scmp.ne.s32.totalorder %s118, %s121
      %p127 = scmp.eq.s32.totalorder %s16, 0
      %p128 = por %p126, %p127
      %p129 = scmp.ne.s32.totalorder %s118, %s121
      %p130 = scmp.eq.s32.totalorder %s21, 1
      %p131 = por %p129, %p130
      %p132 = scmp.ne.s32.totalorder %s121, %s122
      %p133 = scmp.eq.s32.totalorder %s21, 0
      %p134 = por %p132, %p133
      %p135 = scmp.ne.s32.totalorder %s121, %s122
      %p136 = scmp.eq.s32.totalorder %s22, 1
      %p137 = por %p135, %p136
      %p139 = scmp.ne.s32.totalorder %s122, %s138
      %p140 = scmp.eq.s32.totalorder %s22, 0
      %p141 = por %p139, %p140
      %p142 = scmp.le.s32.totalorder 1, %s16
      %p143 = scmp.lt.s32.totalorder %s16, 3
      %p144 = pnand %p142, %p143
      %p145 = pneg %p144
      // Predicated region
      $region9: #{tpu_custom_call.1} parent=5 // pred_check
        _
      $region10: #{tpu_custom_call.1} parent=5 // pred_check_branch
        %147 = sbr.rel (%p144) target = $region12
      $region11: #{tpu_custom_call.1} parent=5 // pred_region
        %s148 = ssub.s32 %s16, 1
        // Predicated region
        $region13: #{tpu_custom_call.1} parent=11 // pred_check
          %p149 = pneg %p80
        $region14: #{tpu_custom_call.1} parent=11 // pred_check_branch
          %151 = sbr.rel (%p149) target = $region16
        $region15: #{tpu_custom_call.1} parent=11 // pred_region
          %s153 = ssub.s32 1024, 1024
          %154 = vsyncadd [#allocation6], %s153
          %s155 = smul.addr %s26, 128
          %s156 = scalar_lea.hbm %s1, %s155
          %s157 = sshll.u32 [#allocation5], 4
          %s158 = int_to_ptr.vmem [resolvable:$true] %s157
          %163 = dma.hbm_to_vmem [thread:$0]  %s156, 1024, %s158, [#allocation6], 128, 128, 8
        $region16: #{tpu_custom_call.1} parent=11 // pred_fallthru
          _
        // Predicated region
        $region17: #{tpu_custom_call.1} parent=11 // pred_check
          %p164 = pneg %p106
        $region18: #{tpu_custom_call.1} parent=11 // pred_check_branch
          %166 = sbr.rel (%p164) target = $region20
        $region19: #{tpu_custom_call.1} parent=11 // pred_region
          %p167 = scmp.lt.s32.totalorder %s26, 0
          %s168 = scalar_select %p167, %s26, 0
          %s169 = scalar_lea.vmem %s2, %s168
        $region20: #{tpu_custom_call.1} parent=11 // pred_fallthru
          _
      $region12: #{tpu_custom_call.1} parent=5 // pred_fallthru
        _
      %p170 = scmp.lt.s32.totalorder %s16, 2
      // Predicated region
      $region21: #{tpu_custom_call.1} parent=5 // pred_check
        %p171 = pneg %p170
      $region22: #{tpu_custom_call.1} parent=5 // pred_check_branch
        %173 = sbr.rel (%p171) target = $region24
      $region23: #{tpu_custom_call.1} parent=5 // pred_region
        // Predicated region
        $region25: #{tpu_custom_call.1} parent=23 // pred_check
          %p174 = pneg %p48
        $region26: #{tpu_custom_call.1} parent=23 // pred_check_branch
          %176 = sbr.rel (%p174) target = $region28
        $region27: #{tpu_custom_call.1} parent=23 // pred_region
          %s177 = sand.u32 %s38, 1
          %s178 = scalar_lea.sflag [#allocation3], %s177
          %s179 = sand.u32 %s38, 1
          %s180 = smul.addr %s179, 8
          %s181 = scalar_lea.vmem [#allocation2], %s180
          %s183 = ssub.s32 128, 128
          %184 = vsyncadd %s178, %s183
          %s185 = smul.addr %s23, 128
          %s186 = scalar_lea.hbm %s0, %s185
          %s188 = sshll.u32 %s181, 4
          %s189 = int_to_ptr.vmem [resolvable:$true] %s188
          %191 = dma.hbm_to_vmem [thread:$0]  %s186, 128, %s189, %s178
        $region28: #{tpu_custom_call.1} parent=23 // pred_fallthru
          _
      $region24: #{tpu_custom_call.1} parent=5 // pred_fallthru
        _
      %p192 = scmp.le.s32.totalorder 1, %s16
      %p193 = scmp.lt.s32.totalorder %s16, 3
      %p194 = pnand %p192, %p193
      %p195 = pneg %p194
      // Predicated region
      $region29: #{tpu_custom_call.1} parent=5 // pred_check
        _
      $region30: #{tpu_custom_call.1} parent=5 // pred_check_branch
        %197 = sbr.rel (%p194) target = $region32
      $region31: #{tpu_custom_call.1} parent=5 // pred_region
        %s198 = ssub.s32 %s16, 1
        %s199 = sand.u32 %s41, 1
        %s200 = scalar_lea.sflag [#allocation3], %s199
        %s201 = sand.u32 %s41, 1
        %s202 = smul.addr %s201, 8
        %s203 = scalar_lea.vmem [#allocation2], %s202
        // Predicated region
        $region33: #{tpu_custom_call.1} parent=31 // pred_check
          %p204 = pneg %p54
        $region34: #{tpu_custom_call.1} parent=31 // pred_check_branch
          %206 = sbr.rel (%p204) target = $region36
        $region35: #{tpu_custom_call.1} parent=31 // pred_region
          %207 = dma.done %s200, 128
        $region36: #{tpu_custom_call.1} parent=31 // pred_fallthru
          _
        // Predicated region
        $region37: #{tpu_custom_call.1} parent=31 // pred_check
          %p208 = pneg %p80
        $region38: #{tpu_custom_call.1} parent=31 // pred_check_branch
          %210 = sbr.rel (%p208) target = $region40
        $region39: #{tpu_custom_call.1} parent=31 // pred_region
          %211 = dma.done [#allocation6], 1024
        $region40: #{tpu_custom_call.1} parent=31 // pred_fallthru
          _
        %s212 = sand.u32 %s41, 1
        %s213 = scalar_lea.sflag [#allocation3], %s212
        %s214 = sand.u32 %s41, 1
        %s215 = smul.addr %s214, 8
        %s216 = scalar_lea.vmem [#allocation2], %s215
        %p217 = pneg %p54
        %p218 = pneg %p51
        %p219 = pneg %p80
        %p220 = pneg %p77
        %p221 = scmp.lt.s32.totalorder %s26, 0
        %s222 = scalar_select %p221, %s26, 0
        %s223 = scalar_lea.vmem %s2, %s222
        %p224 = pneg %p106
        %p225 = pneg %p103
        %p226 = pneg %p134
        %p227 = pneg %p131
        %s228 = sand.u32 %s121, 1
        %s229 = scalar_lea.sflag [#allocation4], %s228
        %s230 = sand.u32 %s121, 1
        %s231 = smul.addr %s230, 8
        %s232 = scalar_lea.vmem [#allocation7], %s231
        %p233 = scmp.lt.s32.totalorder %s26, 0
        %s234 = scalar_select %p233, %s26, 0
        %s235 = scalar_lea.vmem %s2, %s234
        %v236 = vld [vmem:[%s203] sm:$0xff]
        %v237 = vld [vmem:[#allocation5] sm:$0xff]
        %v238 = vld [vmem:[#allocation5 + $0x8] sm:$0xff]
        %v239 = vld [vmem:[#allocation5 + $0x10] sm:$0xff]
        %v240 = vld [vmem:[#allocation5 + $0x18] sm:$0xff]
        %v241 = vld [vmem:[#allocation5 + $0x20] sm:$0xff]
        %v242 = vld [vmem:[#allocation5 + $0x28] sm:$0xff]
        %v243 = vld [vmem:[#allocation5 + $0x30] sm:$0xff]
        %v244 = vld [vmem:[#allocation5 + $0x38] sm:$0xff]
        %v245 = vld [vmem:[%s235] sm:$0x1]
        %v247 = vlaneseq
        %v248 = vshrl.u32 %v247, 7
        %v249 = vsub.s32 0, %v248
        %v250 = vrot.slane %v245, %v249
        %vm252 = vcmask 523264
        %v254 = vsel %vm252, %v236, 0
        %256 = vmatprep.subr.mxu0 0.0
        %257 = vmatpush1.msra.mxu0 %v237
        %258 = vmatprep.subr.mxu0 0.0
        %259 = vmatpush1.msra.mxu0 %v238
        %260 = vmatprep.subr.mxu0 0.0
        %261 = vmatpush1.msra.mxu0 %v239
        %262 = vmatprep.subr.mxu0 0.0
        %263 = vmatpush1.msra.mxu0 %v240
        %264 = vmatprep.subr.mxu0 0.0
        %265 = vmatpush1.msra.mxu0 %v241
        %266 = vmatprep.subr.mxu0 0.0
        %267 = vmatpush1.msra.mxu0 %v242
        %268 = vmatprep.subr.mxu0 0.0
        %269 = vmatpush1.msra.mxu0 %v243
        %270 = vmatprep.subr.mxu0 0.0
        %271 = vmatpush1.msra.mxu0 %v244
        %272 = vmatprep.subr.mxu0 0.0
        %273 = vmatpush1.msra.mxu0 0.0
        %274 = vmatprep.subr.mxu0 0.0
        %275 = vmatpush1.msra.mxu0 0.0
        %276 = vmatprep.subr.mxu0 0.0
        %277 = vmatpush1.msra.mxu0 0.0
        %278 = vmatprep.subr.mxu0 0.0
        %279 = vmatpush1.msra.mxu0 0.0
        %280 = vmatprep.subr.mxu0 0.0
        %281 = vmatpush1.msra.mxu0 0.0
        %282 = vmatprep.subr.mxu0 0.0
        %283 = vmatpush1.msra.mxu0 0.0
        %284 = vmatprep.subr.mxu0 0.0
        %285 = vmatpush1.msra.mxu0 0.0
        %286 = vmatprep.subr.mxu0 0.0
        %287 = vmatpush1.msra.mxu0 0.0
        %288 = vmatprep.subr.mxu0 0.0
        %289 = vmatpush1.msra.mxu0 0.0
        %290 = vmatprep.subr.mxu0 0.0
        %291 = vmatpush1.msra.mxu0 0.0
        %292 = vmatprep.subr.mxu0 0.0
        %293 = vmatpush1.msra.mxu0 0.0
        %294 = vmatprep.subr.mxu0 0.0
        %295 = vmatpush1.msra.mxu0 0.0
        %296 = vmatprep.subr.mxu0 0.0
        %297 = vmatpush1.msra.mxu0 0.0
        %298 = vmatprep.subr.mxu0 0.0
        %299 = vmatpush1.msra.mxu0 0.0
        %300 = vmatprep.subr.mxu0 0.0
        %301 = vmatpush1.msra.mxu0 0.0
        %302 = vmatprep.subr.mxu0 0.0
        %303 = vmatpush1.msra.mxu0 0.0
        %304 = vmatprep.subr.mxu0 0.0
        %305 = vmatpush1.msra.mxu0 0.0
        %306 = vmatprep.subr.mxu0 0.0
        %307 = vmatpush1.msra.mxu0 0.0
        %308 = vmatprep.subr.mxu0 0.0
        %309 = vmatpush1.msra.mxu0 0.0
        %310 = vmatprep.subr.mxu0 0.0
        %311 = vmatpush1.msra.mxu0 0.0
        %312 = vmatprep.subr.mxu0 0.0
        %313 = vmatpush1.msra.mxu0 0.0
        %314 = vmatprep.subr.mxu0 0.0
        %315 = vmatpush1.msra.mxu0 0.0
        %316 = vmatprep.subr.mxu0 0.0
        %317 = vmatpush1.msra.mxu0 0.0
        %318 = vmatprep.subr.mxu0 0.0
        %319 = vmatpush1.msra.mxu0 0.0
        %320 = vmatprep.mubr.f32.mxu0 0.0
        %321 = vmatmul.mubr.f32.gmra.mrb[0].mxu0 %v254
        %v322 = vpop.f32.mrb[0].mxu0
        %v323 = vadd.f32 %v250, %v322
        %v324 = vpop.f32.mrb[0].mxu0
        %325 = vdwg.mxu0
        %326 = vst [vmem:[%s232] sm:$0xff] %v323
        %s327 = sand.u32 %s121, 1
        %s328 = scalar_lea.sflag [#allocation4], %s327
        %s329 = sand.u32 %s121, 1
        %s330 = smul.addr %s329, 8
        %s331 = scalar_lea.vmem [#allocation7], %s330
        // Predicated region
        $region41: #{tpu_custom_call.1} parent=31 // pred_check
          %p332 = pneg %p131
        $region42: #{tpu_custom_call.1} parent=31 // pred_check_branch
          %334 = sbr.rel (%p332) target = $region44
        $region43: #{tpu_custom_call.1} parent=31 // pred_region
          %s336 = ssub.s32 128, 128
          %337 = vsyncadd %s328, %s336
          %s338 = sadd.s32 %s26, %s25
          %s339 = smul.addr %s338, 128
          %s340 = scalar_lea.hbm %s3, %s339
          %s342 = sshll.u32 %s331, 4
          %s343 = int_to_ptr.vmem [resolvable:$true] %s342
          %345 = dma.vmem_to_hbm [thread:$0]  %s343, 128, %s340, %s328
        $region44: #{tpu_custom_call.1} parent=31 // pred_fallthru
          _
      $region32: #{tpu_custom_call.1} parent=5 // pred_fallthru
        _
      %p346 = scmp.le.s32.totalorder 2, %s16
      // Predicated region
      $region45: #{tpu_custom_call.1} parent=5 // pred_check
        %p347 = pneg %p346
      $region46: #{tpu_custom_call.1} parent=5 // pred_check_branch
        %349 = sbr.rel (%p347) target = $region48
      $region47: #{tpu_custom_call.1} parent=5 // pred_region
        %s350 = ssub.s32 %s16, 2
        // Predicated region
        $region49: #{tpu_custom_call.1} parent=47 // pred_check
          %p351 = pneg %p137
        $region50: #{tpu_custom_call.1} parent=47 // pred_check_branch
          %353 = sbr.rel (%p351) target = $region52
        $region51: #{tpu_custom_call.1} parent=47 // pred_region
          %s354 = sand.u32 %s122, 1
          %s355 = scalar_lea.sflag [#allocation4], %s354
          %s356 = sand.u32 %s122, 1
          %s357 = smul.addr %s356, 8
          %s358 = scalar_lea.vmem [#allocation7], %s357
          %359 = dma.done %s355, 128
        $region52: #{tpu_custom_call.1} parent=47 // pred_fallthru
          _
      $region48: #{tpu_custom_call.1} parent=5 // pred_fallthru
        _
    $region6: #{tpu_custom_call.1} parent=1 // loop_footer
      %s20 = sadd.s32 1, %s16
    $region7: #{tpu_custom_call.1} parent=1 // loop_footer_branch
      %15 = sbr.rel target = $region3
    $region8: #{tpu_custom_call.1} parent=1 // loop_exit
      _
    %360 = vsyncpa [#allocation3], 1
    %s361 = scalar_lea.sflag [#allocation3], 1
    %362 = vsyncpa %s361, 1
    %363 = vsyncpa [#allocation6], 1
    %364 = vsyncpa [#allocation4], 1
    %s365 = scalar_lea.sflag [#allocation4], 1
    %366 = vsyncpa %s365, 1

</llo_original>
